<compile_context>
chip_gen: v7x
topology: tpu7x:2x2x1
jax: 0.10.0
libtpu: 0.0.40
codegen_flags: <defaults>
</compile_context>

<pallas_src>
import jax
import jax.numpy as jnp
from jax.experimental import pallas as pl
from jax.experimental.pallas import tpu as pltpu


def _round_up(n, m):
    return ((n + m - 1) // m) * m


def dual_tower_kernel(x_ref, w1_ref, b1_ref, w2_ref, b2_ref, o_ref):
    # Linear 1 on the MXU, f32 accumulation.
    h = jnp.dot(x_ref[...], w1_ref[...], preferred_element_type=jnp.float32)
    # Bias add + ReLU in f32 on the VPU.
    h = jnp.maximum(h + b1_ref[...].astype(jnp.float32), 0.0)
    # Linear 2 (cast activations to the weight dtype for the MXU fast path;
    # exact for f32 weights, standard small bf16 delta otherwise).
    out = jnp.dot(h.astype(w2_ref.dtype), w2_ref[...],
                  preferred_element_type=jnp.float32)
    out = out + b2_ref[...].astype(jnp.float32)
    o_ref[...] = out.astype(o_ref.dtype)


def dual_tower_forward(x, w1, b1, w2, b2, *, tm=1024):
    """Fused Linear(d_in,64) -> ReLU -> Linear(64,emb).

    x : (B, d_in); w1 : (d_in, 64); b1 : (1, 64); w2 : (64, emb); b2 : (1, emb)
    (weights already transposed relative to PyTorch nn.Linear's (out, in)).
    """
    B, d_in = x.shape
    hidden = w1.shape[1]
    emb = w2.shape[1]
    out_dtype = x.dtype

    # Sublane granularity: f32 tiles want row multiples of 8, bf16 of 16.
    sub = 16 if x.dtype == jnp.bfloat16 else 8

    # --- Zero-pad the hidden dim to a full 128-lane width (exact). ---
    hidden_p = _round_up(hidden, 128)
    if hidden_p != hidden:
        pad_h = hidden_p - hidden
        w1 = jnp.pad(w1, ((0, 0), (0, pad_h)))
        b1 = jnp.pad(b1, ((0, 0), (0, pad_h)))
        w2 = jnp.pad(w2, ((0, pad_h), (0, 0)))

    # --- Batch tile: large (mem-bound kernel), clamped to the padded batch;
    #     pad B so the grid divides evenly, slice the padding off afterwards.
    tm = max(sub, min(_round_up(tm, sub), _round_up(B, sub)))
    Bp = _round_up(B, tm)
    if Bp != B:
        x = jnp.pad(x, ((0, Bp - B), (0, 0)))

    grid = (Bp // tm,)

    cost = pl.CostEstimate(
        flops=2 * Bp * (d_in * hidden_p + hidden_p * emb),
        transcendentals=0,
        bytes_accessed=(x.size * x.dtype.itemsize
                        + Bp * emb * jnp.dtype(out_dtype).itemsize
                        + w1.size * w1.dtype.itemsize
                        + b1.size * b1.dtype.itemsize
                        + w2.size * w2.dtype.itemsize
                        + b2.size * b2.dtype.itemsize),
    )

    out = pl.pallas_call(
        dual_tower_kernel,
        out_shape=jax.ShapeDtypeStruct((Bp, emb), out_dtype),
        grid_spec=pltpu.PrefetchScalarGridSpec(
            num_scalar_prefetch=0,
            grid=grid,
            in_specs=[
                pl.BlockSpec((tm, d_in), lambda i: (i, 0)),        # x tile
                pl.BlockSpec((d_in, hidden_p), lambda i: (0, 0)),  # W1 (resident)
                pl.BlockSpec((1, hidden_p), lambda i: (0, 0)),     # b1 (resident)
                pl.BlockSpec((hidden_p, emb), lambda i: (0, 0)),   # W2 (resident)
                pl.BlockSpec((1, emb), lambda i: (0, 0)),          # b2 (resident)
            ],
            out_specs=pl.BlockSpec((tm, emb), lambda i: (i, 0)),
        ),
        compiler_params=pltpu.CompilerParams(
            dimension_semantics=("parallel",),   # lets v7x shard across 2 TCs
        ),
        cost_estimate=cost,
    )(x, w1, b1, w2, b2)

    return out[:B] if Bp != B else out


def reference_forward(x, w1, b1, w2, b2):
    h = jnp.maximum(x @ w1 + b1, 0.0)
    return h @ w2 + b2


if __name__ == "__main__":
    D_IN, HIDDEN, EMB = 16, 64, 32

    key = jax.random.PRNGKey(0)
    kx, kw1, kb1, kw2, kb2 = jax.random.split(key, 5)

    # Deterministic synthetic parameters (stored transposed vs PyTorch).
    w1 = jax.random.normal(kw1, (D_IN, HIDDEN), dtype=jnp.float32) * 0.1
    b1 = jax.random.normal(kb1, (1, HIDDEN), dtype=jnp.float32) * 0.1
    w2 = jax.random.normal(kw2, (HIDDEN, EMB), dtype=jnp.float32) * 0.1
    b2 = jax.random.normal(kb2, (1, EMB), dtype=jnp.float32) * 0.1

    # --- f32 path (tight tolerance vs reference) ---
    B = 64
    x = jax.random.normal(kx, (B, D_IN), dtype=jnp.float32)
    out = jax.block_until_ready(dual_tower_forward(x, w1, b1, w2, b2))
    ref = reference_forward(x, w1, b1, w2, b2)
    assert out.shape == (B, EMB)
    assert jnp.allclose(out, ref, atol=1e-5, rtol=1e-5)

    # --- bf16 streaming path: halves x/W HBM traffic; also exercises batch
    #     padding (B not a multiple of the tile) and a multi-step grid. ---
    B2 = 50
    x2 = jax.random.normal(kx, (B2, D_IN), dtype=jnp.float32)
    xb = x2.astype(jnp.bfloat16)
    w1b = w1.astype(jnp.bfloat16)
    w2b = w2.astype(jnp.bfloat16)
    out_bf = jax.block_until_ready(
        dual_tower_forward(xb, w1b, b1, w2b, b2, tm=16))
    ref_bf = reference_forward(xb.astype(jnp.float32), w1b.astype(jnp.float32),
                               b1, w2b.astype(jnp.float32), b2)
    assert out_bf.shape == (B2, EMB)
    assert jnp.allclose(out_bf.astype(jnp.float32), ref_bf,
                        atol=5e-2, rtol=5e-2)

    print("KERNEL_OK")
</pallas_src>

<mosaic_0001>
module attributes {stable_mosaic.version = 11 : i64} {
  func.func @dual_tower_kernel(%arg0: i32, %arg1: memref<64x16xf32, #tpu.memory_space<vmem>>, %arg2: memref<16x128xf32, #tpu.memory_space<vmem>>, %arg3: memref<1x128xf32, #tpu.memory_space<vmem>>, %arg4: memref<128x32xf32, #tpu.memory_space<vmem>>, %arg5: memref<1x32xf32, #tpu.memory_space<vmem>>, %arg6: memref<64x32xf32, #tpu.memory_space<vmem>>) attributes {dimension_semantics = [#tpu.dimension_semantics<parallel>], iteration_bounds = array<i64: 1>, scalar_prefetch = 0 : i64, scratch_operands = 0 : i64, tpu.core_type = #tpu.core_type<tc>, window_params = [{transform_indices = @transform_0, window_bounds = array<i64: 64, 16>}, {pipeline_mode = #tpu.pipeline_mode<synchronous>, transform_indices = @transform_1, window_bounds = array<i64: 16, 128>}, {pipeline_mode = #tpu.pipeline_mode<synchronous>, transform_indices = @transform_2, window_bounds = array<i64: 1, 128>}, {pipeline_mode = #tpu.pipeline_mode<synchronous>, transform_indices = @transform_3, window_bounds = array<i64: 128, 32>}, {pipeline_mode = #tpu.pipeline_mode<synchronous>, transform_indices = @transform_4, window_bounds = array<i64: 1, 32>}, {transform_indices = @transform_5, window_bounds = array<i64: 64, 32>}]} {
    %c0 = arith.constant 0 : index
    %c0_0 = arith.constant 0 : index
    %0 = vector.load %arg1[%c0, %c0_0] : memref<64x16xf32, #tpu.memory_space<vmem>>, vector<64x16xf32>
    %c0_1 = arith.constant 0 : index
    %c0_2 = arith.constant 0 : index
    %1 = vector.load %arg2[%c0_1, %c0_2] : memref<16x128xf32, #tpu.memory_space<vmem>>, vector<16x128xf32>
    %cst = arith.constant dense<0.000000e+00> : vector<64x128xf32>
    %2 = tpu.matmul %0, %1, %cst {dimension_numbers = #tpu.dot_dimension_numbers<[1], [0], [0], [1], [0, 0, 1, 1], [], []>} : vector<64x16xf32>, vector<16x128xf32>, vector<64x128xf32> -> vector<64x128xf32>
    %c0_3 = arith.constant 0 : index
    %c0_4 = arith.constant 0 : index
    %3 = vector.load %arg3[%c0_3, %c0_4] : memref<1x128xf32, #tpu.memory_space<vmem>>, vector<1x128xf32>
    %4 = vector.broadcast %3 : vector<1x128xf32> to vector<64x128xf32>
    %5 = arith.addf %2, %4 : vector<64x128xf32>
    %cst_5 = arith.constant 0.000000e+00 : f32
    %6 = vector.broadcast %cst_5 : f32 to vector<64x128xf32>
    %7 = arith.maximumf %5, %6 : vector<64x128xf32>
    %c0_6 = arith.constant 0 : index
    %c0_7 = arith.constant 0 : index
    %8 = vector.load %arg4[%c0_6, %c0_7] : memref<128x32xf32, #tpu.memory_space<vmem>>, vector<128x32xf32>
    %cst_8 = arith.constant dense<0.000000e+00> : vector<64x32xf32>
    %9 = tpu.matmul %7, %8, %cst_8 {dimension_numbers = #tpu.dot_dimension_numbers<[1], [0], [0], [1], [0, 0, 1, 1], [], []>} : vector<64x128xf32>, vector<128x32xf32>, vector<64x32xf32> -> vector<64x32xf32>
    %c0_9 = arith.constant 0 : index
    %c0_10 = arith.constant 0 : index
    %10 = vector.load %arg5[%c0_9, %c0_10] : memref<1x32xf32, #tpu.memory_space<vmem>>, vector<1x32xf32>
    %11 = vector.broadcast %10 : vector<1x32xf32> to vector<64x32xf32>
    %12 = arith.addf %9, %11 : vector<64x32xf32>
    %c0_11 = arith.constant 0 : index
    %c0_12 = arith.constant 0 : index
    %13 = vector.load %arg6[%c0_11, %c0_12] : memref<64x32xf32, #tpu.memory_space<vmem>>, vector<64x32xf32>
    tpu.vector_store %arg6[%c0_11, %c0_12], %12 {strides = array<i32>} : memref<64x32xf32, #tpu.memory_space<vmem>>, vector<64x32xf32>,
    return
  }
  func.func @transform_0(%arg0: i32) -> (i32, i32) {
    %c0_i32 = arith.constant 0 : i32
    %c0_i32_0 = arith.constant 0 : i32
    return %arg0, %c0_i32 : i32, i32
  }
  func.func @transform_1(%arg0: i32) -> (i32, i32) {
    %c0_i32 = arith.constant 0 : i32
    %c0_i32_0 = arith.constant 0 : i32
    %c0_i32_1 = arith.constant 0 : i32
    return %c0_i32, %c0_i32_0 : i32, i32
  }
  func.func @transform_2(%arg0: i32) -> (i32, i32) {
    %c0_i32 = arith.constant 0 : i32
    %c0_i32_0 = arith.constant 0 : i32
    %c0_i32_1 = arith.constant 0 : i32
    return %c0_i32, %c0_i32_0 : i32, i32
  }
  func.func @transform_3(%arg0: i32) -> (i32, i32) {
    %c0_i32 = arith.constant 0 : i32
    %c0_i32_0 = arith.constant 0 : i32
    %c0_i32_1 = arith.constant 0 : i32
    return %c0_i32, %c0_i32_0 : i32, i32
  }
  func.func @transform_4(%arg0: i32) -> (i32, i32) {
    %c0_i32 = arith.constant 0 : i32
    %c0_i32_0 = arith.constant 0 : i32
    %c0_i32_1 = arith.constant 0 : i32
    return %c0_i32, %c0_i32_0 : i32, i32
  }
  func.func @transform_5(%arg0: i32) -> (i32, i32) {
    %c0_i32 = arith.constant 0 : i32
    %c0_i32_0 = arith.constant 0 : i32
    return %arg0, %c0_i32 : i32, i32
  }
}

</mosaic_0001>

<llo_original>
// kernel: tpu_custom_call.1
$region0: #{tpu_custom_call.1}
  #allocation0 [shape = 'u32[]', space=smem, size = 0x4, offset = 0x4, fixed_abs, tag = 'smem constant byte address 0x4 - core index']
  #allocation1 [shape = 'u32[144,128]{1,0:T(1,128)}', space=vmem, size = 0x12000, scoped, tag = 'internal scratch']
  %s0 = inlined_call_operand.vmem [shape: f32[64,16], index: 0, kind: input, shape index: {}]
  %s1 = inlined_call_operand.vmem [shape: f32[16,128], index: 1, kind: input, shape index: {}]
  %s2 = inlined_call_operand.vmem [shape: f32[1,128], index: 2, kind: input, shape index: {}]
  %s3 = inlined_call_operand.vmem [shape: f32[128,32], index: 3, kind: input, shape index: {}]
  %s4 = inlined_call_operand.vmem [shape: f32[1,32], index: 4, kind: input, shape index: {}]
  %s5 = inlined_call_operand.vmem [shape: f32[64,32], index: 5, kind: output, shape index: {}]
  %s6 = sld [smem:[#allocation0]]
  $region30: #{tpu_custom_call.1} parent=0
    _
  %s8 = ssub.s32 1, %s6
  %s9 = scalar_select 0, %s8, %s6
  // Predicated region
  $region2: #{tpu_custom_call.1} parent=0 // pred_check
    _
  $region3: #{tpu_custom_call.1} parent=0 // pred_check_branch
    %11 = sbr.rel (0) target = $region5
  $region4: #{tpu_custom_call.1} parent=0 // pred_region
    _
  $region5: #{tpu_custom_call.1} parent=0 // pred_fallthru
    _
  // Predicated region
  $region6: #{tpu_custom_call.1} parent=0 // pred_check
    _
  $region7: #{tpu_custom_call.1} parent=0 // pred_check_branch
    %13 = sbr.rel (0) target = $region9
  $region8: #{tpu_custom_call.1} parent=0 // pred_region
    _
  $region9: #{tpu_custom_call.1} parent=0 // pred_fallthru
    _
  // Predicated region
  $region10: #{tpu_custom_call.1} parent=0 // pred_check
    _
  $region11: #{tpu_custom_call.1} parent=0 // pred_check_branch
    %15 = sbr.rel (0) target = $region13
  $region12: #{tpu_custom_call.1} parent=0 // pred_region
    _
  $region13: #{tpu_custom_call.1} parent=0 // pred_fallthru
    _
  // Predicated region
  $region14: #{tpu_custom_call.1} parent=0 // pred_check
    _
  $region15: #{tpu_custom_call.1} parent=0 // pred_check_branch
    %17 = sbr.rel (0) target = $region17
  $region16: #{tpu_custom_call.1} parent=0 // pred_region
    _
  $region17: #{tpu_custom_call.1} parent=0 // pred_fallthru
    _
  // Predicated region
  $region18: #{tpu_custom_call.1} parent=0 // pred_check
    _
  $region19: #{tpu_custom_call.1} parent=0 // pred_check_branch
    %19 = sbr.rel (0) target = $region21
  $region20: #{tpu_custom_call.1} parent=0 // pred_region
    _
  $region21: #{tpu_custom_call.1} parent=0 // pred_fallthru
    _
  %v20 = vld [vmem:[%s0] sm:$0xff]
  %v21 = vld [vmem:[%s0 + $0x8] sm:$0xff]
  %v22 = vld [vmem:[%s0 + $0x10] sm:$0xff]
  %v23 = vld [vmem:[%s0 + $0x18] sm:$0xff]
  %v24 = vld [vmem:[%s0 + $0x20] sm:$0xff]
  %v25 = vld [vmem:[%s0 + $0x28] sm:$0xff]
  %v26 = vld [vmem:[%s0 + $0x30] sm:$0xff]
  %v27 = vld [vmem:[%s0 + $0x38] sm:$0xff]
  %v28 = vld [vmem:[%s1] sm:$0xff]
  %v29 = vld [vmem:[%s1 + $0x8] sm:$0xff]
  %v30 = vld [vmem:[%s2] sm:$0x1]
  %v32 = vlaneseq
  %v33 = vshrl.u32 %v32, 7
  %v34 = vsub.s32 0, %v33
  %v35 = vrot.slane %v30, %v34
  %vm37 = vcmask 130048
  %v39 = vsel %vm37, %v20, 0
  %v42 = vsel %vm37, %v21, 0
  %v45 = vsel %vm37, %v22, 0
  %v48 = vsel %vm37, %v23, 0
  %v51 = vsel %vm37, %v24, 0
  %v54 = vsel %vm37, %v25, 0
  %v57 = vsel %vm37, %v26, 0
  %v60 = vsel %vm37, %v27, 0
  %62 = vmatprep.subr.mxu0 0.0
  %63 = vmatpush1.msra.mxu0 %v28
  %64 = vmatprep.subr.mxu0 0.0
  %65 = vmatpush1.msra.mxu0 %v29
  %66 = vmatprep.subr.mxu0 0.0
  %67 = vmatpush1.msra.mxu0 0.0
  %68 = vmatprep.subr.mxu0 0.0
  %69 = vmatpush1.msra.mxu0 0.0
  %70 = vmatprep.subr.mxu0 0.0
  %71 = vmatpush1.msra.mxu0 0.0
  %72 = vmatprep.subr.mxu0 0.0
  %73 = vmatpush1.msra.mxu0 0.0
  %74 = vmatprep.subr.mxu0 0.0
  %75 = vmatpush1.msra.mxu0 0.0
  %76 = vmatprep.subr.mxu0 0.0
  %77 = vmatpush1.msra.mxu0 0.0
  %78 = vmatprep.subr.mxu0 0.0
  %79 = vmatpush1.msra.mxu0 0.0
  %80 = vmatprep.subr.mxu0 0.0
  %81 = vmatpush1.msra.mxu0 0.0
  %82 = vmatprep.subr.mxu0 0.0
  %83 = vmatpush1.msra.mxu0 0.0
  %84 = vmatprep.subr.mxu0 0.0
  %85 = vmatpush1.msra.mxu0 0.0
  %86 = vmatprep.subr.mxu0 0.0
  %87 = vmatpush1.msra.mxu0 0.0
  %88 = vmatprep.subr.mxu0 0.0
  %89 = vmatpush1.msra.mxu0 0.0
  %90 = vmatprep.subr.mxu0 0.0
  %91 = vmatpush1.msra.mxu0 0.0
  %92 = vmatprep.subr.mxu0 0.0
  %93 = vmatpush1.msra.mxu0 0.0
  %94 = vmatprep.subr.mxu0 0.0
  %95 = vmatpush1.msra.mxu0 0.0
  %96 = vmatprep.subr.mxu0 0.0
  %97 = vmatpush1.msra.mxu0 0.0
  %98 = vmatprep.subr.mxu0 0.0
  %99 = vmatpush1.msra.mxu0 0.0
  %100 = vmatprep.subr.mxu0 0.0
  %101 = vmatpush1.msra.mxu0 0.0
  %102 = vmatprep.subr.mxu0 0.0
  %103 = vmatpush1.msra.mxu0 0.0
  %104 = vmatprep.subr.mxu0 0.0
  %105 = vmatpush1.msra.mxu0 0.0
  %106 = vmatprep.subr.mxu0 0.0
  %107 = vmatpush1.msra.mxu0 0.0
  %108 = vmatprep.subr.mxu0 0.0
  %109 = vmatpush1.msra.mxu0 0.0
  %110 = vmatprep.subr.mxu0 0.0
  %111 = vmatpush1.msra.mxu0 0.0
  %112 = vmatprep.subr.mxu0 0.0
  %113 = vmatpush1.msra.mxu0 0.0
  %114 = vmatprep.subr.mxu0 0.0
  %115 = vmatpush1.msra.mxu0 0.0
  %116 = vmatprep.subr.mxu0 0.0
  %117 = vmatpush1.msra.mxu0 0.0
  %118 = vmatprep.subr.mxu0 0.0
  %119 = vmatpush1.msra.mxu0 0.0
  %120 = vmatprep.subr.mxu0 0.0
  %121 = vmatpush1.msra.mxu0 0.0
  %122 = vmatprep.subr.mxu0 0.0
  %123 = vmatpush1.msra.mxu0 0.0
  %124 = vmatprep.subr.mxu0 0.0
  %125 = vmatpush1.msra.mxu0 0.0
  %126 = vmatprep.mubr.f32.mxu0 0.0
  %127 = vmatmul.mubr.f32.gmra.mrb[0].mxu0 %v39
  %v128 = vpop.f32.mrb[0].mxu0
  %v129 = vadd.f32 %v35, %v128
  %v130 = vpop.f32.mrb[0].mxu0
  %131 = vmatprep.mubr.f32.mxu0 0.0
  %132 = vmatmul.mubr.f32.gmra.mrb[0].mxu0 %v42
  %v133 = vpop.f32.mrb[0].mxu0
  %v134 = vadd.f32 %v35, %v133
  %v135 = vpop.f32.mrb[0].mxu0
  %136 = vmatprep.mubr.f32.mxu0 0.0
  %137 = vmatmul.mubr.f32.gmra.mrb[0].mxu0 %v45
  %v138 = vpop.f32.mrb[0].mxu0
  %v139 = vadd.f32 %v35, %v138
  %v140 = vpop.f32.mrb[0].mxu0
  %141 = vmatprep.mubr.f32.mxu0 0.0
  %142 = vmatmul.mubr.f32.gmra.mrb[0].mxu0 %v48
  %v143 = vpop.f32.mrb[0].mxu0
  %v144 = vadd.f32 %v35, %v143
  %v145 = vpop.f32.mrb[0].mxu0
  %146 = vmatprep.mubr.f32.mxu0 0.0
  %147 = vmatmul.mubr.f32.gmra.mrb[0].mxu0 %v51
  %v148 = vpop.f32.mrb[0].mxu0
  %v149 = vadd.f32 %v35, %v148
  %v150 = vpop.f32.mrb[0].mxu0
  %151 = vmatprep.mubr.f32.mxu0 0.0
  %152 = vmatmul.mubr.f32.gmra.mrb[0].mxu0 %v54
  %v153 = vpop.f32.mrb[0].mxu0
  %v154 = vadd.f32 %v35, %v153
  %v155 = vpop.f32.mrb[0].mxu0
  %156 = vmatprep.mubr.f32.mxu0 0.0
  %157 = vmatmul.mubr.f32.gmra.mrb[0].mxu0 %v57
  %v158 = vpop.f32.mrb[0].mxu0
  %v159 = vadd.f32 %v35, %v158
  %v160 = vpop.f32.mrb[0].mxu0
  %161 = vmatprep.mubr.f32.mxu0 0.0
  %162 = vmatmul.mubr.f32.gmra.mrb[0].mxu0 %v60
  %v163 = vpop.f32.mrb[0].mxu0
  %v164 = vadd.f32 %v35, %v163
  %v165 = vpop.f32.mrb[0].mxu0
  %166 = vdwg.mxu0
  %v167 = vmax.f32 %v129, 0.0
  %v168 = vmax.f32 %v134, 0.0
  %v169 = vmax.f32 %v139, 0.0
  %v170 = vmax.f32 %v144, 0.0
  %v171 = vmax.f32 %v149, 0.0
  %v172 = vmax.f32 %v154, 0.0
  %v173 = vmax.f32 %v159, 0.0
  %v174 = vmax.f32 %v164, 0.0
  %v175 = vld [vmem:[%s3] sm:$0xff]
  %v176 = vld [vmem:[%s3 + $0x8] sm:$0xff]
  %v177 = vld [vmem:[%s3 + $0x10] sm:$0xff]
  %v178 = vld [vmem:[%s3 + $0x18] sm:$0xff]
  %v179 = vld [vmem:[%s3 + $0x20] sm:$0xff]
  %v180 = vld [vmem:[%s3 + $0x28] sm:$0xff]
  %v181 = vld [vmem:[%s3 + $0x30] sm:$0xff]
  %v182 = vld [vmem:[%s3 + $0x38] sm:$0xff]
  %v183 = vld [vmem:[%s3 + $0x40] sm:$0xff]
  %v184 = vld [vmem:[%s3 + $0x48] sm:$0xff]
  %v185 = vld [vmem:[%s3 + $0x50] sm:$0xff]
  %v186 = vld [vmem:[%s3 + $0x58] sm:$0xff]
  %v187 = vld [vmem:[%s3 + $0x60] sm:$0xff]
  %v188 = vld [vmem:[%s3 + $0x68] sm:$0xff]
  %v189 = vld [vmem:[%s3 + $0x70] sm:$0xff]
  %v190 = vld [vmem:[%s3 + $0x78] sm:$0xff]
  %v191 = vld [vmem:[%s4] sm:$0x1]
  %v193 = vlaneseq
  %v194 = vshrl.u32 %v193, 7
  %v195 = vsub.s32 0, %v194
  %v196 = vrot.slane %v191, %v195
  %198 = vmatprep.subr.mxu0 0.0
  %199 = vmatpush1.msra.mxu0 %v175
  %200 = vmatprep.subr.mxu0 0.0
  %201 = vmatpush1.msra.mxu0 %v176
  %202 = vmatprep.subr.mxu0 0.0
  %203 = vmatpush1.msra.mxu0 %v177
  %204 = vmatprep.subr.mxu0 0.0
  %205 = vmatpush1.msra.mxu0 %v178
  %206 = vmatprep.subr.mxu0 0.0
  %207 = vmatpush1.msra.mxu0 %v179
  %208 = vmatprep.subr.mxu0 0.0
  %209 = vmatpush1.msra.mxu0 %v180
  %210 = vmatprep.subr.mxu0 0.0
  %211 = vmatpush1.msra.mxu0 %v181
  %212 = vmatprep.subr.mxu0 0.0
  %213 = vmatpush1.msra.mxu0 %v182
  %214 = vmatprep.subr.mxu0 0.0
  %215 = vmatpush1.msra.mxu0 %v183
  %216 = vmatprep.subr.mxu0 0.0
  %217 = vmatpush1.msra.mxu0 %v184
  %218 = vmatprep.subr.mxu0 0.0
  %219 = vmatpush1.msra.mxu0 %v185
  %220 = vmatprep.subr.mxu0 0.0
  %221 = vmatpush1.msra.mxu0 %v186
  %222 = vmatprep.subr.mxu0 0.0
  %223 = vmatpush1.msra.mxu0 %v187
  %224 = vmatprep.subr.mxu0 0.0
  %225 = vmatpush1.msra.mxu0 %v188
  %226 = vmatprep.subr.mxu0 0.0
  %227 = vmatpush1.msra.mxu0 %v189
  %228 = vmatprep.subr.mxu0 0.0
  %229 = vmatpush1.msra.mxu0 %v190
  %230 = vmatprep.subr.mxu0 0.0
  %231 = vmatpush1.msra.mxu0 0.0
  %232 = vmatprep.subr.mxu0 0.0
  %233 = vmatpush1.msra.mxu0 0.0
  %234 = vmatprep.subr.mxu0 0.0
  %235 = vmatpush1.msra.mxu0 0.0
  %236 = vmatprep.subr.mxu0 0.0
  %237 = vmatpush1.msra.mxu0 0.0
  %238 = vmatprep.subr.mxu0 0.0
  %239 = vmatpush1.msra.mxu0 0.0
  %240 = vmatprep.subr.mxu0 0.0
  %241 = vmatpush1.msra.mxu0 0.0
  %242 = vmatprep.subr.mxu0 0.0
  %243 = vmatpush1.msra.mxu0 0.0
  %244 = vmatprep.subr.mxu0 0.0
  %245 = vmatpush1.msra.mxu0 0.0
  %246 = vmatprep.subr.mxu0 0.0
  %247 = vmatpush1.msra.mxu0 0.0
  %248 = vmatprep.subr.mxu0 0.0
  %249 = vmatpush1.msra.mxu0 0.0
  %250 = vmatprep.subr.mxu0 0.0
  %251 = vmatpush1.msra.mxu0 0.0
  %252 = vmatprep.subr.mxu0 0.0
  %253 = vmatpush1.msra.mxu0 0.0
  %254 = vmatprep.subr.mxu0 0.0
  %255 = vmatpush1.msra.mxu0 0.0
  %256 = vmatprep.subr.mxu0 0.0
  %257 = vmatpush1.msra.mxu0 0.0
  %258 = vmatprep.subr.mxu0 0.0
  %259 = vmatpush1.msra.mxu0 0.0
  %260 = vmatprep.subr.mxu0 0.0
  %261 = vmatpush1.msra.mxu0 0.0
  %262 = vmatprep.mubr.f32.mxu0 0.0
  %263 = vmatmul.mubr.f32.gmra.mrb[0].mxu0 %v167
  %v264 = vpop.f32.mrb[0].mxu0
  %v265 = vadd.f32 %v196, %v264
  %v266 = vpop.f32.mrb[0].mxu0
  %267 = vmatprep.mubr.f32.mxu0 0.0
  %268 = vmatmul.mubr.f32.gmra.mrb[0].mxu0 %v168
  %v269 = vpop.f32.mrb[0].mxu0
  %v270 = vadd.f32 %v196, %v269
  %v271 = vpop.f32.mrb[0].mxu0
  %272 = vmatprep.mubr.f32.mxu0 0.0
  %273 = vmatmul.mubr.f32.gmra.mrb[0].mxu0 %v169
  %v274 = vpop.f32.mrb[0].mxu0
  %v275 = vadd.f32 %v196, %v274
  %v276 = vpop.f32.mrb[0].mxu0
  %277 = vmatprep.mubr.f32.mxu0 0.0
  %278 = vmatmul.mubr.f32.gmra.mrb[0].mxu0 %v170
  %v279 = vpop.f32.mrb[0].mxu0
  %v280 = vadd.f32 %v196, %v279
  %v281 = vpop.f32.mrb[0].mxu0
  %282 = vmatprep.mubr.f32.mxu0 0.0
  %283 = vmatmul.mubr.f32.gmra.mrb[0].mxu0 %v171
  %v284 = vpop.f32.mrb[0].mxu0
  %v285 = vadd.f32 %v196, %v284
  %v286 = vpop.f32.mrb[0].mxu0
  %287 = vmatprep.mubr.f32.mxu0 0.0
  %288 = vmatmul.mubr.f32.gmra.mrb[0].mxu0 %v172
  %v289 = vpop.f32.mrb[0].mxu0
  %v290 = vadd.f32 %v196, %v289
  %v291 = vpop.f32.mrb[0].mxu0
  %292 = vmatprep.mubr.f32.mxu0 0.0
  %293 = vmatmul.mubr.f32.gmra.mrb[0].mxu0 %v173
  %v294 = vpop.f32.mrb[0].mxu0
  %v295 = vadd.f32 %v196, %v294
  %v296 = vpop.f32.mrb[0].mxu0
  %297 = vmatprep.mubr.f32.mxu0 0.0
  %298 = vmatmul.mubr.f32.gmra.mrb[0].mxu0 %v174
  %v299 = vpop.f32.mrb[0].mxu0
  %v300 = vadd.f32 %v196, %v299
  %v301 = vpop.f32.mrb[0].mxu0
  %302 = vdwg.mxu0
  %vm303 = vcmask 261120
  %304 = vst.msk [vmem:[%s5] sm:$0xff] %vm303, %v265
  %305 = vst.msk [vmem:[%s5 + $0x8] sm:$0xff] %vm303, %v270
  %306 = vst.msk [vmem:[%s5 + $0x10] sm:$0xff] %vm303, %v275
  %307 = vst.msk [vmem:[%s5 + $0x18] sm:$0xff] %vm303, %v280
  %308 = vst.msk [vmem:[%s5 + $0x20] sm:$0xff] %vm303, %v285
  %309 = vst.msk [vmem:[%s5 + $0x28] sm:$0xff] %vm303, %v290
  %310 = vst.msk [vmem:[%s5 + $0x30] sm:$0xff] %vm303, %v295
  %311 = vst.msk [vmem:[%s5 + $0x38] sm:$0xff] %vm303, %v300
  // Predicated region
  $region22: #{tpu_custom_call.1} parent=0 // pred_check
    _
  $region23: #{tpu_custom_call.1} parent=0 // pred_check_branch
    %313 = sbr.rel (0) target = $region25
  $region24: #{tpu_custom_call.1} parent=0 // pred_region
    _
  $region25: #{tpu_custom_call.1} parent=0 // pred_fallthru
    _
  // Predicated region
  $region26: #{tpu_custom_call.1} parent=0 // pred_check
    _
  $region27: #{tpu_custom_call.1} parent=0 // pred_check_branch
    %315 = sbr.rel (0) target = $region29
  $region28: #{tpu_custom_call.1} parent=0 // pred_region
    _
  $region29: #{tpu_custom_call.1} parent=0 // pred_fallthru
    _

</llo_original>
